<compile_context>
chip_gen: v6e
topology: v6e:2x2x1
jax: 0.10.0
libtpu: 0.0.40
codegen_flags: <defaults>
</compile_context>

<pallas_src>
import jax
import jax.numpy as jnp
from jax.experimental import pallas as pl
from jax.experimental.pallas import tpu as pltpu


TILE_B = 256  # multiple of 256 (v6e/v7x MXU N) and of 128 (v5e); ~1 MiB peak per block


def sara_kernel(xt_ref,
                w0_ref, b0_ref,
                w1_ref, b1_ref,
                w2_ref, b2_ref,
                w3_ref, b3_ref,
                o_ref):
    xt = xt_ref[...]                                  # (2, TILE_B)  f32
    w0 = w0_ref[...]                                  # (32, 2)      f32

    # Layer 0 (2 -> 32): K=2 contraction as two VPU broadcast-FMAs (keeps MXU free).
    h0 = (w0[:, 0:1] * xt[0:1, :]
          + w0[:, 1:2] * xt[1:2, :]
          + b0_ref[...])                              # (32, TILE_B)
    h0 = jnp.maximum(h0, 0.0)

    # Layer 1 (32 -> 64): MXU, bf16 operands, f32 accumulation.
    h1 = jnp.dot(w1_ref[...], h0.astype(jnp.bfloat16),
                 preferred_element_type=jnp.float32) + b1_ref[...]
    h1 = jnp.maximum(h1, 0.0)                         # (64, TILE_B)

    # Layer 2 (64 -> 128): MXU, bf16 operands, f32 accumulation.
    h2 = jnp.dot(w2_ref[...], h1.astype(jnp.bfloat16),
                 preferred_element_type=jnp.float32) + b2_ref[...]
    h2 = jnp.maximum(h2, 0.0)                         # (128, TILE_B)

    # Layer 3 (128 -> 1): VPU multiply + sublane (XLU) reduce -> lane-dense (1, TILE_B).
    out = jnp.sum(h2 * w3_ref[...], axis=0, keepdims=True) + b3_ref[...]
    o_ref[...] = out.astype(o_ref.dtype)              # (1, TILE_B)


def sara_forward(x, params):
    """x: (B, 2) float32. params: PyTorch-layout weights (out,in) and biases (out,)."""
    B = x.shape[0]
    n_tiles = pl.cdiv(B, TILE_B)
    Bp = n_tiles * TILE_B

    # Transpose to feature-major / batch-on-lanes, pad batch to a multiple of TILE_B.
    xt = jnp.zeros((2, Bp), jnp.float32).at[:, :B].set(x.T.astype(jnp.float32))

    w0 = params["w0"].astype(jnp.float32)                    # (32, 2)
    b0 = params["b0"].reshape(-1, 1).astype(jnp.float32)     # (32, 1)
    w1 = params["w1"].astype(jnp.bfloat16)                   # (64, 32)  bf16 for MXU
    b1 = params["b1"].reshape(-1, 1).astype(jnp.float32)     # (64, 1)
    w2 = params["w2"].astype(jnp.bfloat16)                   # (128, 64) bf16 for MXU
    b2 = params["b2"].reshape(-1, 1).astype(jnp.float32)     # (128, 1)
    w3 = params["w3"].T.astype(jnp.float32)                  # (128, 1)  column for VPU reduce
    b3 = params["b3"].reshape(1, 1).astype(jnp.float32)      # (1, 1)

    def const(shape):
        # Constant block index -> weight/bias stays resident in VMEM across grid steps.
        return pl.BlockSpec(shape, lambda i: (0, 0))

    flops = 2 * B * (2 * 32 + 32 * 64 + 64 * 128 + 128 * 1)
    weight_bytes = sum(int(a.size) * a.dtype.itemsize
                       for a in (w0, b0, w1, b1, w2, b2, w3, b3))
    bytes_accessed = int(B * 2 * 4 + B * 1 * 4 + weight_bytes)

    out_t = pl.pallas_call(
        sara_kernel,
        out_shape=jax.ShapeDtypeStruct((1, Bp), jnp.float32),
        grid=(n_tiles,),
        in_specs=[
            pl.BlockSpec((2, TILE_B), lambda i: (0, i)),      # x^T batch tile
            const((32, 2)), const((32, 1)),
            const((64, 32)), const((64, 1)),
            const((128, 64)), const((128, 1)),
            const((128, 1)), const((1, 1)),
        ],
        out_specs=pl.BlockSpec((1, TILE_B), lambda i: (0, i)),  # lane-dense output row
        compiler_params=pltpu.CompilerParams(
            dimension_semantics=("parallel",)),
        cost_estimate=pl.CostEstimate(
            flops=flops, transcendentals=0, bytes_accessed=bytes_accessed),
    )(xt, w0, b0, w1, b1, w2, b2, w3, b3)

    # Drop batch padding and restore (B, 1) layout.
    return out_t[0, :B].reshape(B, 1)


def init_params(key):
    """PyTorch nn.Linear-style init: W (out,in), b (out,), U(-1/sqrt(fan_in), 1/sqrt(fan_in))."""
    layer_dims = [(2, 32), (32, 64), (64, 128), (128, 1)]
    params = {}
    keys = jax.random.split(key, 2 * len(layer_dims))
    for i, (fan_in, fan_out) in enumerate(layer_dims):
        bound = 1.0 / (fan_in ** 0.5)
        params[f"w{i}"] = jax.random.uniform(keys[2 * i], (fan_out, fan_in),
                                             minval=-bound, maxval=bound,
                                             dtype=jnp.float32)
        params[f"b{i}"] = jax.random.uniform(keys[2 * i + 1], (fan_out,),
                                             minval=-bound, maxval=bound,
                                             dtype=jnp.float32)
    return params


def sara_reference(x, params):
    h = x
    for i in range(3):
        h = jnp.maximum(h @ params[f"w{i}"].T + params[f"b{i}"], 0.0)
    return h @ params["w3"].T + params["b3"]


if __name__ == "__main__":
    key = jax.random.PRNGKey(0)
    k_param, k_x = jax.random.split(key)

    params = init_params(k_param)
    B = 300  # exercises multiple grid steps plus a padded tail tile
    x = jax.random.normal(k_x, (B, 2), dtype=jnp.float32)

    fwd = jax.jit(sara_forward)
    out = jax.block_until_ready(fwd(x, params))

    ref = sara_reference(x, params)
    assert out.shape == (B, 1)
    # Middle layers use bf16 MXU operands with f32 accumulation -> loose-but-tight-enough tol.
    max_err = float(jnp.max(jnp.abs(out - ref)))
    assert jnp.allclose(out, ref, atol=3e-2, rtol=3e-2), f"mismatch vs reference: {max_err}"

    print("KERNEL_OK")
</pallas_src>

<mosaic_0001>
module attributes {stable_mosaic.version = 11 : i64} {
  func.func @sara_kernel(%arg0: i32, %arg1: memref<2x256xf32, #tpu.memory_space<vmem>>, %arg2: memref<32x2xf32, #tpu.memory_space<vmem>>, %arg3: memref<32x1xf32, #tpu.memory_space<vmem>>, %arg4: memref<64x32xbf16, #tpu.memory_space<vmem>>, %arg5: memref<64x1xf32, #tpu.memory_space<vmem>>, %arg6: memref<128x64xbf16, #tpu.memory_space<vmem>>, %arg7: memref<128x1xf32, #tpu.memory_space<vmem>>, %arg8: memref<128x1xf32, #tpu.memory_space<vmem>>, %arg9: memref<1x1xf32, #tpu.memory_space<vmem>>, %arg10: memref<1x256xf32, #tpu.memory_space<vmem>>) attributes {dimension_semantics = [#tpu.dimension_semantics<parallel>], iteration_bounds = array<i64: 2>, scalar_prefetch = 0 : i64, scratch_operands = 0 : i64, tpu.core_type = #tpu.core_type<tc>, window_params = [{transform_indices = @transform_0, window_bounds = array<i64: 2, 256>}, {pipeline_mode = #tpu.pipeline_mode<synchronous>, transform_indices = @transform_1, window_bounds = array<i64: 32, 2>}, {pipeline_mode = #tpu.pipeline_mode<synchronous>, transform_indices = @transform_2, window_bounds = array<i64: 32, 1>}, {pipeline_mode = #tpu.pipeline_mode<synchronous>, transform_indices = @transform_3, window_bounds = array<i64: 64, 32>}, {pipeline_mode = #tpu.pipeline_mode<synchronous>, transform_indices = @transform_4, window_bounds = array<i64: 64, 1>}, {pipeline_mode = #tpu.pipeline_mode<synchronous>, transform_indices = @transform_5, window_bounds = array<i64: 128, 64>}, {pipeline_mode = #tpu.pipeline_mode<synchronous>, transform_indices = @transform_6, window_bounds = array<i64: 128, 1>}, {pipeline_mode = #tpu.pipeline_mode<synchronous>, transform_indices = @transform_7, window_bounds = array<i64: 128, 1>}, {pipeline_mode = #tpu.pipeline_mode<synchronous>, transform_indices = @transform_8, window_bounds = array<i64: 1, 1>}, {transform_indices = @transform_9, window_bounds = array<i64: 1, 256>}]} {
    %c0 = arith.constant 0 : index
    %c0_0 = arith.constant 0 : index
    %0 = vector.load %arg1[%c0, %c0_0] : memref<2x256xf32, #tpu.memory_space<vmem>>, vector<2x256xf32>
    %c0_1 = arith.constant 0 : index
    %c0_2 = arith.constant 0 : index
    %1 = vector.load %arg2[%c0_1, %c0_2] : memref<32x2xf32, #tpu.memory_space<vmem>>, vector<32x2xf32>
    %2 = vector.extract_strided_slice %1 {offsets = [0, 0], sizes = [32, 1], strides = [1, 1]} : vector<32x2xf32> to vector<32x1xf32>
    %3 = vector.extract_strided_slice %0 {offsets = [0, 0], sizes = [1, 256], strides = [1, 1]} : vector<2x256xf32> to vector<1x256xf32>
    %4 = vector.broadcast %2 : vector<32x1xf32> to vector<32x256xf32>
    %5 = vector.broadcast %3 : vector<1x256xf32> to vector<32x256xf32>
    %6 = arith.mulf %4, %5 : vector<32x256xf32>
    %7 = vector.extract_strided_slice %1 {offsets = [0, 1], sizes = [32, 1], strides = [1, 1]} : vector<32x2xf32> to vector<32x1xf32>
    %8 = vector.extract_strided_slice %0 {offsets = [1, 0], sizes = [1, 256], strides = [1, 1]} : vector<2x256xf32> to vector<1x256xf32>
    %9 = vector.broadcast %7 : vector<32x1xf32> to vector<32x256xf32>
    %10 = vector.broadcast %8 : vector<1x256xf32> to vector<32x256xf32>
    %11 = arith.mulf %9, %10 : vector<32x256xf32>
    %12 = arith.addf %6, %11 : vector<32x256xf32>
    %c0_3 = arith.constant 0 : index
    %c0_4 = arith.constant 0 : index
    %13 = vector.load %arg3[%c0_3, %c0_4] : memref<32x1xf32, #tpu.memory_space<vmem>>, vector<32x1xf32>
    %14 = vector.broadcast %13 : vector<32x1xf32> to vector<32x256xf32>
    %15 = arith.addf %12, %14 : vector<32x256xf32>
    %cst = arith.constant 0.000000e+00 : f32
    %16 = vector.broadcast %cst : f32 to vector<32x256xf32>
    %17 = arith.maximumf %15, %16 : vector<32x256xf32>
    %c0_5 = arith.constant 0 : index
    %c0_6 = arith.constant 0 : index
    %18 = vector.load %arg4[%c0_5, %c0_6] : memref<64x32xbf16, #tpu.memory_space<vmem>>, vector<64x32xbf16>
    %19 = arith.truncf %17 : vector<32x256xf32> to vector<32x256xbf16>
    %cst_7 = arith.constant dense<0.000000e+00> : vector<64x256xf32>
    %20 = tpu.matmul %18, %19, %cst_7 {dimension_numbers = #tpu.dot_dimension_numbers<[1], [0], [0], [1], [0, 0, 1, 1], [], []>} : vector<64x32xbf16>, vector<32x256xbf16>, vector<64x256xf32> -> vector<64x256xf32>
    %c0_8 = arith.constant 0 : index
    %c0_9 = arith.constant 0 : index
    %21 = vector.load %arg5[%c0_8, %c0_9] : memref<64x1xf32, #tpu.memory_space<vmem>>, vector<64x1xf32>
    %22 = vector.broadcast %21 : vector<64x1xf32> to vector<64x256xf32>
    %23 = arith.addf %20, %22 : vector<64x256xf32>
    %cst_10 = arith.constant 0.000000e+00 : f32
    %24 = vector.broadcast %cst_10 : f32 to vector<64x256xf32>
    %25 = arith.maximumf %23, %24 : vector<64x256xf32>
    %c0_11 = arith.constant 0 : index
    %c0_12 = arith.constant 0 : index
    %26 = vector.load %arg6[%c0_11, %c0_12] : memref<128x64xbf16, #tpu.memory_space<vmem>>, vector<128x64xbf16>
    %27 = arith.truncf %25 : vector<64x256xf32> to vector<64x256xbf16>
    %cst_13 = arith.constant dense<0.000000e+00> : vector<128x256xf32>
    %28 = tpu.matmul %26, %27, %cst_13 {dimension_numbers = #tpu.dot_dimension_numbers<[1], [0], [0], [1], [0, 0, 1, 1], [], []>} : vector<128x64xbf16>, vector<64x256xbf16>, vector<128x256xf32> -> vector<128x256xf32>
    %c0_14 = arith.constant 0 : index
    %c0_15 = arith.constant 0 : index
    %29 = vector.load %arg7[%c0_14, %c0_15] : memref<128x1xf32, #tpu.memory_space<vmem>>, vector<128x1xf32>
    %30 = vector.broadcast %29 : vector<128x1xf32> to vector<128x256xf32>
    %31 = arith.addf %28, %30 : vector<128x256xf32>
    %cst_16 = arith.constant 0.000000e+00 : f32
    %32 = vector.broadcast %cst_16 : f32 to vector<128x256xf32>
    %33 = arith.maximumf %31, %32 : vector<128x256xf32>
    %c0_17 = arith.constant 0 : index
    %c0_18 = arith.constant 0 : index
    %34 = vector.load %arg8[%c0_17, %c0_18] : memref<128x1xf32, #tpu.memory_space<vmem>>, vector<128x1xf32>
    %35 = vector.broadcast %34 : vector<128x1xf32> to vector<128x256xf32>
    %36 = arith.mulf %33, %35 : vector<128x256xf32>
    %cst_19 = arith.constant dense<0.000000e+00> : vector<256xf32>
    %37 = vector.multi_reduction <add>, %36, %cst_19 [0] : vector<128x256xf32> to vector<256xf32>
    %38 = vector.shape_cast %37 : vector<256xf32> to vector<1x256xf32>
    %c0_20 = arith.constant 0 : index
    %c0_21 = arith.constant 0 : index
    %39 = vector.load %arg9[%c0_20, %c0_21] : memref<1x1xf32, #tpu.memory_space<vmem>>, vector<1x1xf32>
    %40 = vector.broadcast %39 : vector<1x1xf32> to vector<1x256xf32>
    %41 = arith.addf %38, %40 : vector<1x256xf32>
    %c0_22 = arith.constant 0 : index
    %c0_23 = arith.constant 0 : index
    %42 = vector.load %arg10[%c0_22, %c0_23] : memref<1x256xf32, #tpu.memory_space<vmem>>, vector<1x256xf32>
    tpu.vector_store %arg10[%c0_22, %c0_23], %41 {strides = array<i32>} : memref<1x256xf32, #tpu.memory_space<vmem>>, vector<1x256xf32>,
    return
  }
  func.func @transform_0(%arg0: i32) -> (i32, i32) {
    %c0_i32 = arith.constant 0 : i32
    %c0_i32_0 = arith.constant 0 : i32
    return %c0_i32, %arg0 : i32, i32
  }
  func.func @transform_1(%arg0: i32) -> (i32, i32) {
    %c0_i32 = arith.constant 0 : i32
    %c0_i32_0 = arith.constant 0 : i32
    %c0_i32_1 = arith.constant 0 : i32
    return %c0_i32, %c0_i32_0 : i32, i32
  }
  func.func @transform_2(%arg0: i32) -> (i32, i32) {
    %c0_i32 = arith.constant 0 : i32
    %c0_i32_0 = arith.constant 0 : i32
    %c0_i32_1 = arith.constant 0 : i32
    return %c0_i32, %c0_i32_0 : i32, i32
  }
  func.func @transform_3(%arg0: i32) -> (i32, i32) {
    %c0_i32 = arith.constant 0 : i32
    %c0_i32_0 = arith.constant 0 : i32
    %c0_i32_1 = arith.constant 0 : i32
    return %c0_i32, %c0_i32_0 : i32, i32
  }
  func.func @transform_4(%arg0: i32) -> (i32, i32) {
    %c0_i32 = arith.constant 0 : i32
    %c0_i32_0 = arith.constant 0 : i32
    %c0_i32_1 = arith.constant 0 : i32
    return %c0_i32, %c0_i32_0 : i32, i32
  }
  func.func @transform_5(%arg0: i32) -> (i32, i32) {
    %c0_i32 = arith.constant 0 : i32
    %c0_i32_0 = arith.constant 0 : i32
    %c0_i32_1 = arith.constant 0 : i32
    return %c0_i32, %c0_i32_0 : i32, i32
  }
  func.func @transform_6(%arg0: i32) -> (i32, i32) {
    %c0_i32 = arith.constant 0 : i32
    %c0_i32_0 = arith.constant 0 : i32
    %c0_i32_1 = arith.constant 0 : i32
    return %c0_i32, %c0_i32_0 : i32, i32
  }
  func.func @transform_7(%arg0: i32) -> (i32, i32) {
    %c0_i32 = arith.constant 0 : i32
    %c0_i32_0 = arith.constant 0 : i32
    %c0_i32_1 = arith.constant 0 : i32
    return %c0_i32, %c0_i32_0 : i32, i32
  }
  func.func @transform_8(%arg0: i32) -> (i32, i32) {
    %c0_i32 = arith.constant 0 : i32
    %c0_i32_0 = arith.constant 0 : i32
    %c0_i32_1 = arith.constant 0 : i32
    return %c0_i32, %c0_i32_0 : i32, i32
  }
  func.func @transform_9(%arg0: i32) -> (i32, i32) {
    %c0_i32 = arith.constant 0 : i32
    %c0_i32_0 = arith.constant 0 : i32
    return %c0_i32, %arg0 : i32, i32
  }
}

</mosaic_0001>

<llo_original>
// kernel: sara_forward.1
$region0: #{sara_forward.1}
  #allocation0 [shape = 'u32[]', space=smem, size = 0x4, offset = 0x4, fixed_abs, tag = 'smem constant byte address 0x4 - core index']
  #allocation1 [shape = 'u32[144,128]{1,0:T(1,128)}', space=vmem, size = 0x12000, scoped, tag = 'internal scratch']
  #allocation2 [shape = 'f32[1,1]{1,0:T(1,128)S(1)}', space=vmem, size = 0x200, scoped, tag = 'scoped memory for sara_forward.1']
  %s0 = inlined_call_operand.vmem [shape: f32[2,512], index: 0, kind: input, shape index: {}]
  %s1 = inlined_call_operand.vmem [shape: f32[32,2], index: 1, kind: input, shape index: {}]
  %s2 = inlined_call_operand.vmem [shape: f32[32,1], index: 2, kind: input, shape index: {}]
  %s3 = inlined_call_operand.vmem [shape: bf16[64,32], index: 3, kind: input, shape index: {}]
  %s4 = inlined_call_operand.vmem [shape: f32[64,1], index: 4, kind: input, shape index: {}]
  %s5 = inlined_call_operand.vmem [shape: bf16[128,64], index: 5, kind: input, shape index: {}]
  %s6 = inlined_call_operand.vmem [shape: f32[128,1], index: 6, kind: input, shape index: {}]
  %s7 = inlined_call_operand.vmem [shape: f32[128,1], index: 7, kind: input, shape index: {}]
  %s8 = inlined_call_operand.<no memory space> [shape: f32[1,1], index: 8, kind: input, shape index: {}]
  %s9 = inlined_call_operand.vmem [shape: f32[1,512], index: 9, kind: output, shape index: {}]
  %s10 = sld [smem:[#allocation0]]
  $region69: #{sara_forward.1} parent=0
    _
  %s12 = ssub.s32 1, %s10
  %s13 = scalar_select 0, %s12, %s10
  %v14 = vstv %s8
  %15 = vst [vmem:[#allocation2] sm:$0x1] %v14
  loop: start=0, step=1, limit=4
  $region2: #{sara_forward.1} parent=0 // loop_pre_header
    _
  $region3: #{sara_forward.1} parent=0 // loop_header
    %s17 = sphi 0, %s21
    %p18 = scmp.ge.s32.totalorder %s17, 4
    %s27 = sphi 0, %s29
    %s30 = sphi 0, %s27
    %s31 = sphi 0, %s30
    %s47 = sphi 0, %s31
    %s51 = sphi 0, %s51
    %s53 = sphi 0, %s51
    %s54 = sphi 0, %s53
    %s68 = sphi 0, %s54
    %s72 = sphi 0, %s72
    %s74 = sphi 0, %s72
    %s75 = sphi 0, %s74
    %s89 = sphi 0, %s75
    %s93 = sphi 0, %s93
    %s95 = sphi 0, %s93
    %s96 = sphi 0, %s95
    %s110 = sphi 0, %s96
    %s114 = sphi 0, %s114
    %s116 = sphi 0, %s114
    %s117 = sphi 0, %s116
    %s131 = sphi 0, %s117
    %s135 = sphi 0, %s135
    %s137 = sphi 0, %s135
    %s138 = sphi 0, %s137
    %s152 = sphi 0, %s138
    %s156 = sphi 0, %s156
    %s158 = sphi 0, %s156
    %s159 = sphi 0, %s158
    %s173 = sphi 0, %s159
    %s177 = sphi 0, %s177
    %s179 = sphi 0, %s177
    %s180 = sphi 0, %s179
    %s194 = sphi 0, %s180
    %s198 = sphi 0, %s198
    %s200 = sphi 0, %s198
    %s201 = sphi 0, %s200
    %s215 = sphi 0, %s201
    %s221 = sphi 0, %s223
    %s224 = sphi 0, %s221
    %s225 = sphi 0, %s224
    %s241 = sphi 0, %s225
  $region4: #{sara_forward.1} parent=0 // loop_header_branch
    %20 = sbr.rel (%p18) target = $region8
  $region5: #{sara_forward.1} parent=0 // loop_body
    %s22 = ssub.s32 %s17, 1
    %s23 = ssub.s32 %s17, 2
    %s24 = sadd.s32 %s17, 1
    %s25 = ssub.s32 %s17, %s24
    %p26 = scmp.eq.s32.totalorder %s25, 0
    %s28 = sadd.s32 %s27, 1
    %s29 = scalar_select %p26, %s27, %s28
    %p32 = pneg %p26
    %p33 = scmp.eq.s32.totalorder %s17, 1
    %p34 = por %p32, %p33
    %p35 = scmp.ne.s32.totalorder %s27, %s30
    %p36 = scmp.eq.s32.totalorder %s17, 0
    %p37 = por %p35, %p36
    %p38 = scmp.ne.s32.totalorder %s27, %s30
    %p39 = scmp.eq.s32.totalorder %s22, 1
    %p40 = por %p38, %p39
    %p41 = scmp.ne.s32.totalorder %s30, %s31
    %p42 = scmp.eq.s32.totalorder %s22, 0
    %p43 = por %p41, %p42
    %p44 = scmp.ne.s32.totalorder %s30, %s31
    %p45 = scmp.eq.s32.totalorder %s23, 1
    %p46 = por %p44, %p45
    %p48 = scmp.ne.s32.totalorder %s31, %s47
    %p49 = scmp.eq.s32.totalorder %s23, 0
    %p50 = por %p48, %p49
    %s52 = sadd.s32 %s51, 1
    %p55 = scmp.eq.s32.totalorder %s17, 1
    %p56 = scmp.ne.s32.totalorder %s51, %s53
    %p57 = scmp.eq.s32.totalorder %s17, 0
    %p58 = por %p56, %p57
    %p59 = scmp.ne.s32.totalorder %s51, %s53
    %p60 = scmp.eq.s32.totalorder %s22, 1
    %p61 = por %p59, %p60
    %p62 = scmp.ne.s32.totalorder %s53, %s54
    %p63 = scmp.eq.s32.totalorder %s22, 0
    %p64 = por %p62, %p63
    %p65 = scmp.ne.s32.totalorder %s53, %s54
    %p66 = scmp.eq.s32.totalorder %s23, 1
    %p67 = por %p65, %p66
    %p69 = scmp.ne.s32.totalorder %s54, %s68
    %p70 = scmp.eq.s32.totalorder %s23, 0
    %p71 = por %p69, %p70
    %s73 = sadd.s32 %s72, 1
    %p76 = scmp.eq.s32.totalorder %s17, 1
    %p77 = scmp.ne.s32.totalorder %s72, %s74
    %p78 = scmp.eq.s32.totalorder %s17, 0
    %p79 = por %p77, %p78
    %p80 = scmp.ne.s32.totalorder %s72, %s74
    %p81 = scmp.eq.s32.totalorder %s22, 1
    %p82 = por %p80, %p81
    %p83 = scmp.ne.s32.totalorder %s74, %s75
    %p84 = scmp.eq.s32.totalorder %s22, 0
    %p85 = por %p83, %p84
    %p86 = scmp.ne.s32.totalorder %s74, %s75
    %p87 = scmp.eq.s32.totalorder %s23, 1
    %p88 = por %p86, %p87
    %p90 = scmp.ne.s32.totalorder %s75, %s89
    %p91 = scmp.eq.s32.totalorder %s23, 0
    %p92 = por %p90, %p91
    %s94 = sadd.s32 %s93, 1
    %p97 = scmp.eq.s32.totalorder %s17, 1
    %p98 = scmp.ne.s32.totalorder %s93, %s95
    %p99 = scmp.eq.s32.totalorder %s17, 0
    %p100 = por %p98, %p99
    %p101 = scmp.ne.s32.totalorder %s93, %s95
    %p102 = scmp.eq.s32.totalorder %s22, 1
    %p103 = por %p101, %p102
    %p104 = scmp.ne.s32.totalorder %s95, %s96
    %p105 = scmp.eq.s32.totalorder %s22, 0
    %p106 = por %p104, %p105
    %p107 = scmp.ne.s32.totalorder %s95, %s96
    %p108 = scmp.eq.s32.totalorder %s23, 1
    %p109 = por %p107, %p108
    %p111 = scmp.ne.s32.totalorder %s96, %s110
    %p112 = scmp.eq.s32.totalorder %s23, 0
    %p113 = por %p111, %p112
    %s115 = sadd.s32 %s114, 1
    %p118 = scmp.eq.s32.totalorder %s17, 1
    %p119 = scmp.ne.s32.totalorder %s114, %s116
    %p120 = scmp.eq.s32.totalorder %s17, 0
    %p121 = por %p119, %p120
    %p122 = scmp.ne.s32.totalorder %s114, %s116
    %p123 = scmp.eq.s32.totalorder %s22, 1
    %p124 = por %p122, %p123
    %p125 = scmp.ne.s32.totalorder %s116, %s117
    %p126 = scmp.eq.s32.totalorder %s22, 0
    %p127 = por %p125, %p126
    %p128 = scmp.ne.s32.totalorder %s116, %s117
    %p129 = scmp.eq.s32.totalorder %s23, 1
    %p130 = por %p128, %p129
    %p132 = scmp.ne.s32.totalorder %s117, %s131
    %p133 = scmp.eq.s32.totalorder %s23, 0
    %p134 = por %p132, %p133
    %s136 = sadd.s32 %s135, 1
    %p139 = scmp.eq.s32.totalorder %s17, 1
    %p140 = scmp.ne.s32.totalorder %s135, %s137
    %p141 = scmp.eq.s32.totalorder %s17, 0
    %p142 = por %p140, %p141
    %p143 = scmp.ne.s32.totalorder %s135, %s137
    %p144 = scmp.eq.s32.totalorder %s22, 1
    %p145 = por %p143, %p144
    %p146 = scmp.ne.s32.totalorder %s137, %s138
    %p147 = scmp.eq.s32.totalorder %s22, 0
    %p148 = por %p146, %p147
    %p149 = scmp.ne.s32.totalorder %s137, %s138
    %p150 = scmp.eq.s32.totalorder %s23, 1
    %p151 = por %p149, %p150
    %p153 = scmp.ne.s32.totalorder %s138, %s152
    %p154 = scmp.eq.s32.totalorder %s23, 0
    %p155 = por %p153, %p154
    %s157 = sadd.s32 %s156, 1
    %p160 = scmp.eq.s32.totalorder %s17, 1
    %p161 = scmp.ne.s32.totalorder %s156, %s158
    %p162 = scmp.eq.s32.totalorder %s17, 0
    %p163 = por %p161, %p162
    %p164 = scmp.ne.s32.totalorder %s156, %s158
    %p165 = scmp.eq.s32.totalorder %s22, 1
    %p166 = por %p164, %p165
    %p167 = scmp.ne.s32.totalorder %s158, %s159
    %p168 = scmp.eq.s32.totalorder %s22, 0
    %p169 = por %p167, %p168
    %p170 = scmp.ne.s32.totalorder %s158, %s159
    %p171 = scmp.eq.s32.totalorder %s23, 1
    %p172 = por %p170, %p171
    %p174 = scmp.ne.s32.totalorder %s159, %s173
    %p175 = scmp.eq.s32.totalorder %s23, 0
    %p176 = por %p174, %p175
    %s178 = sadd.s32 %s177, 1
    %p181 = scmp.eq.s32.totalorder %s17, 1
    %p182 = scmp.ne.s32.totalorder %s177, %s179
    %p183 = scmp.eq.s32.totalorder %s17, 0
    %p184 = por %p182, %p183
    %p185 = scmp.ne.s32.totalorder %s177, %s179
    %p186 = scmp.eq.s32.totalorder %s22, 1
    %p187 = por %p185, %p186
    %p188 = scmp.ne.s32.totalorder %s179, %s180
    %p189 = scmp.eq.s32.totalorder %s22, 0
    %p190 = por %p188, %p189
    %p191 = scmp.ne.s32.totalorder %s179, %s180
    %p192 = scmp.eq.s32.totalorder %s23, 1
    %p193 = por %p191, %p192
    %p195 = scmp.ne.s32.totalorder %s180, %s194
    %p196 = scmp.eq.s32.totalorder %s23, 0
    %p197 = por %p195, %p196
    %s199 = sadd.s32 %s198, 1
    %p202 = scmp.eq.s32.totalorder %s17, 1
    %p203 = scmp.ne.s32.totalorder %s198, %s200
    %p204 = scmp.eq.s32.totalorder %s17, 0
    %p205 = por %p203, %p204
    %p206 = scmp.ne.s32.totalorder %s198, %s200
    %p207 = scmp.eq.s32.totalorder %s22, 1
    %p208 = por %p206, %p207
    %p209 = scmp.ne.s32.totalorder %s200, %s201
    %p210 = scmp.eq.s32.totalorder %s22, 0
    %p211 = por %p209, %p210
    %p212 = scmp.ne.s32.totalorder %s200, %s201
    %p213 = scmp.eq.s32.totalorder %s23, 1
    %p214 = por %p212, %p213
    %p216 = scmp.ne.s32.totalorder %s201, %s215
    %p217 = scmp.eq.s32.totalorder %s23, 0
    %p218 = por %p216, %p217
    %s219 = ssub.s32 %s17, %s24
    %p220 = scmp.eq.s32.totalorder %s219, 0
    %s222 = sadd.s32 %s221, 1
    %s223 = scalar_select %p220, %s221, %s222
    %p226 = pneg %p220
    %p227 = scmp.eq.s32.totalorder %s17, 1
    %p228 = por %p226, %p227
    %p229 = scmp.ne.s32.totalorder %s221, %s224
    %p230 = scmp.eq.s32.totalorder %s17, 0
    %p231 = por %p229, %p230
    %p232 = scmp.ne.s32.totalorder %s221, %s224
    %p233 = scmp.eq.s32.totalorder %s22, 1
    %p234 = por %p232, %p233
    %p235 = scmp.ne.s32.totalorder %s224, %s225
    %p236 = scmp.eq.s32.totalorder %s22, 0
    %p237 = por %p235, %p236
    %p238 = scmp.ne.s32.totalorder %s224, %s225
    %p239 = scmp.eq.s32.totalorder %s23, 1
    %p240 = por %p238, %p239
    %p242 = scmp.ne.s32.totalorder %s225, %s241
    %p243 = scmp.eq.s32.totalorder %s23, 0
    %p244 = por %p242, %p243
    %p245 = scmp.le.s32.totalorder 1, %s17
    %p246 = scmp.lt.s32.totalorder %s17, 3
    %p247 = pnand %p245, %p246
    %p248 = pneg %p247
    // Predicated region
    $region9: #{sara_forward.1} parent=5 // pred_check
      _
    $region10: #{sara_forward.1} parent=5 // pred_check_branch
      %250 = sbr.rel (%p247) target = $region12
    $region11: #{sara_forward.1} parent=5 // pred_region
      %s251 = ssub.s32 %s17, 1
      // Predicated region
      $region13: #{sara_forward.1} parent=11 // pred_check
        %p252 = pneg %p64
      $region14: #{sara_forward.1} parent=11 // pred_check_branch
        %254 = sbr.rel (%p252) target = $region16
      $region15: #{sara_forward.1} parent=11 // pred_region
        _
      $region16: #{sara_forward.1} parent=11 // pred_fallthru
        _
      // Predicated region
      $region17: #{sara_forward.1} parent=11 // pred_check
        %p255 = pneg %p85
      $region18: #{sara_forward.1} parent=11 // pred_check_branch
        %257 = sbr.rel (%p255) target = $region20
      $region19: #{sara_forward.1} parent=11 // pred_region
        _
      $region20: #{sara_forward.1} parent=11 // pred_fallthru
        _
      // Predicated region
      $region21: #{sara_forward.1} parent=11 // pred_check
        %p258 = pneg %p106
      $region22: #{sara_forward.1} parent=11 // pred_check_branch
        %260 = sbr.rel (%p258) target = $region24
      $region23: #{sara_forward.1} parent=11 // pred_region
        _
      $region24: #{sara_forward.1} parent=11 // pred_fallthru
        _
      // Predicated region
      $region25: #{sara_forward.1} parent=11 // pred_check
        %p261 = pneg %p127
      $region26: #{sara_forward.1} parent=11 // pred_check_branch
        %263 = sbr.rel (%p261) target = $region28
      $region27: #{sara_forward.1} parent=11 // pred_region
        _
      $region28: #{sara_forward.1} parent=11 // pred_fallthru
        _
      // Predicated region
      $region29: #{sara_forward.1} parent=11 // pred_check
        %p264 = pneg %p148
      $region30: #{sara_forward.1} parent=11 // pred_check_branch
        %266 = sbr.rel (%p264) target = $region32
      $region31: #{sara_forward.1} parent=11 // pred_region
        _
      $region32: #{sara_forward.1} parent=11 // pred_fallthru
        _
      // Predicated region
      $region33: #{sara_forward.1} parent=11 // pred_check
        %p267 = pneg %p169
      $region34: #{sara_forward.1} parent=11 // pred_check_branch
        %269 = sbr.rel (%p267) target = $region36
      $region35: #{sara_forward.1} parent=11 // pred_region
        _
      $region36: #{sara_forward.1} parent=11 // pred_fallthru
        _
      // Predicated region
      $region37: #{sara_forward.1} parent=11 // pred_check
        %p270 = pneg %p190
      $region38: #{sara_forward.1} parent=11 // pred_check_branch
        %272 = sbr.rel (%p270) target = $region40
      $region39: #{sara_forward.1} parent=11 // pred_region
        _
      $region40: #{sara_forward.1} parent=11 // pred_fallthru
        _
      // Predicated region
      $region41: #{sara_forward.1} parent=11 // pred_check
        %p273 = pneg %p211
      $region42: #{sara_forward.1} parent=11 // pred_check_branch
        %275 = sbr.rel (%p273) target = $region44
      $region43: #{sara_forward.1} parent=11 // pred_region
        _
      $region44: #{sara_forward.1} parent=11 // pred_fallthru
        _
    $region12: #{sara_forward.1} parent=5 // pred_fallthru
      _
    %p276 = scmp.lt.s32.totalorder %s17, 2
    // Predicated region
    $region45: #{sara_forward.1} parent=5 // pred_check
      %p277 = pneg %p276
    $region46: #{sara_forward.1} parent=5 // pred_check_branch
      %279 = sbr.rel (%p277) target = $region48
    $region47: #{sara_forward.1} parent=5 // pred_region
      // Predicated region
      $region49: #{sara_forward.1} parent=47 // pred_check
        %p280 = pneg %p37
      $region50: #{sara_forward.1} parent=47 // pred_check_branch
        %282 = sbr.rel (%p280) target = $region52
      $region51: #{sara_forward.1} parent=47 // pred_region
        %s283 = smul.u32 2, %s17
        %p284 = scmp.lt.s32.totalorder %s283, 3
        %s285 = scalar_select %p284, %s283, 3
        %s286 = smul.addr %s285, 2
        %s287 = scalar_lea.vmem %s0, %s286
        %s288 = smul.u32 2, %s17
      $region52: #{sara_forward.1} parent=47 // pred_fallthru
        _
    $region48: #{sara_forward.1} parent=5 // pred_fallthru
      _
    %p289 = scmp.le.s32.totalorder 1, %s17
    %p290 = scmp.lt.s32.totalorder %s17, 3
    %p291 = pnand %p289, %p290
    %p292 = pneg %p291
    // Predicated region
    $region53: #{sara_forward.1} parent=5 // pred_check
      _
    $region54: #{sara_forward.1} parent=5 // pred_check_branch
      %294 = sbr.rel (%p291) target = $region56
    $region55: #{sara_forward.1} parent=5 // pred_region
      %s295 = ssub.s32 %s17, 1
      %s296 = smul.u32 2, %s22
      %p297 = scmp.lt.s32.totalorder %s296, 3
      %s298 = scalar_select %p297, %s296, 3
      %s299 = smul.addr %s298, 2
      %s300 = scalar_lea.vmem %s0, %s299
      %p301 = pneg %p43
      %p302 = pneg %p40
      %p303 = pneg %p64
      %p304 = pneg %p61
      %p305 = pneg %p85
      %p306 = pneg %p82
      %p307 = pneg %p106
      %p308 = pneg %p103
      %p309 = pneg %p127
      %p310 = pneg %p124
      %p311 = pneg %p148
      %p312 = pneg %p145
      %p313 = pneg %p169
      %p314 = pneg %p166
      %p315 = pneg %p190
      %p316 = pneg %p187
      %p317 = pneg %p211
      %p318 = pneg %p208
      %p319 = pneg %p237
      %p320 = pneg %p234
      %s321 = smul.u32 2, %s22
      %p322 = scmp.lt.s32.totalorder %s321, 3
      %s323 = scalar_select %p322, %s321, 3
      %s324 = scalar_lea.vmem %s9, %s323
      %s325 = smul.u32 2, %s22
      %p326 = scmp.lt.s32.totalorder %s325, 3
      %s327 = scalar_select %p326, %s325, 3
      %s328 = smul.addr %s327, 2
      %s329 = scalar_lea.vmem %s0, %s328
      %s330 = smul.u32 2, %s22
      %s331 = smul.u32 2, %s22
      %p332 = scmp.lt.s32.totalorder %s331, 3
      %s333 = scalar_select %p332, %s331, 3
      %s334 = scalar_lea.vmem %s9, %s333
      %s335 = smul.u32 2, %s22
      %v337 = vld [vmem:[%s329] sm:$0xf]
      %v338 = vld [vmem:[%s1] sm:$0xff]
      %v339 = vld [vmem:[%s1 + $0x8] sm:$0xff]
      %v340 = vld [vmem:[%s1 + $0x10] sm:$0xff]
      %v341 = vld [vmem:[%s1 + $0x18] sm:$0xff]
      %343 = vset.pattern.permute.xlu0 0
      %344 = vperm.xlu0 %343, %v338
      %v345 = vpop.permute.xlu0 %344
      %348 = vset.pattern.permute.xlu0 0
      %349 = vperm.xlu0 %348, %v339
      %v350 = vpop.permute.xlu0 %349
      %353 = vset.pattern.permute.xlu0 0
      %354 = vperm.xlu0 %353, %v340
      %v355 = vpop.permute.xlu0 %354
      %358 = vset.pattern.permute.xlu0 0
      %359 = vperm.xlu0 %358, %v341
      %v360 = vpop.permute.xlu0 %359
      %v363 = vlaneseq
      %v364 = vshrl.u32 %v363, 7
      %v365 = vsub.s32 0, %v364
      %v366 = vrot.slane %v337, %v365
      %v367 = vlaneseq
      %v368 = vshrl.u32 %v367, 7
      %v369 = vsub.s32 2, %v368
      %v370 = vrot.slane %v337, %v369
      %v373 = vlaneseq
      %v374 = vshrl.u32 %v373, 7
      %v375 = vsub.s32 0, %v374
      %v376 = vrot.slane %v366, %v375
      %v377 = vlaneseq
      %v378 = vshrl.u32 %v377, 7
      %v379 = vsub.s32 0, %v378
      %v380 = vrot.slane %v370, %v379
      %v381 = vmul.f32 %v345, %v376
      %v382 = vmul.f32 %v345, %v380
      %v383 = vmul.f32 %v350, %v376
      %v384 = vmul.f32 %v350, %v380
      %v385 = vmul.f32 %v355, %v376
      %v386 = vmul.f32 %v355, %v380
      %v387 = vmul.f32 %v360, %v376
      %v388 = vmul.f32 %v360, %v380
      %389 = vset.pattern.permute.xlu0 1
      %390 = vperm.xlu0 %389, %v338
      %v391 = vpop.permute.xlu0 %390
      %393 = vset.pattern.permute.xlu0 1
      %394 = vperm.xlu0 %393, %v339
      %v395 = vpop.permute.xlu0 %394
      %397 = vset.pattern.permute.xlu0 1
      %398 = vperm.xlu0 %397, %v340
      %v399 = vpop.permute.xlu0 %398
      %401 = vset.pattern.permute.xlu0 1
      %402 = vperm.xlu0 %401, %v341
      %v403 = vpop.permute.xlu0 %402
      %v405 = vlaneseq
      %v406 = vshrl.u32 %v405, 7
      %v407 = vsub.s32 1, %v406
      %v408 = vrot.slane %v337, %v407
      %v409 = vlaneseq
      %v410 = vshrl.u32 %v409, 7
      %v411 = vsub.s32 3, %v410
      %v412 = vrot.slane %v337, %v411
      %v415 = vlaneseq
      %v416 = vshrl.u32 %v415, 7
      %v417 = vsub.s32 1, %v416
      %v418 = vrot.slane %v408, %v417
      %v419 = vlaneseq
      %v420 = vshrl.u32 %v419, 7
      %v421 = vsub.s32 1, %v420
      %v422 = vrot.slane %v412, %v421
      %v423 = vmul.f32 %v391, %v418
      %v424 = vmul.f32 %v391, %v422
      %v425 = vmul.f32 %v395, %v418
      %v426 = vmul.f32 %v395, %v422
      %v427 = vmul.f32 %v399, %v418
      %v428 = vmul.f32 %v399, %v422
      %v429 = vmul.f32 %v403, %v418
      %v430 = vmul.f32 %v403, %v422
      %v431 = vadd.f32 %v381, %v423
      %v432 = vadd.f32 %v382, %v424
      %v433 = vadd.f32 %v383, %v425
      %v434 = vadd.f32 %v384, %v426
      %v435 = vadd.f32 %v385, %v427
      %v436 = vadd.f32 %v386, %v428
      %v437 = vadd.f32 %v387, %v429
      %v438 = vadd.f32 %v388, %v430
      %v439 = vld [vmem:[%s2] sm:$0xff]
      %v440 = vld [vmem:[%s2 + $0x8] sm:$0xff]
      %v441 = vld [vmem:[%s2 + $0x10] sm:$0xff]
      %v442 = vld [vmem:[%s2 + $0x18] sm:$0xff]
      %444 = vset.pattern.permute.xlu0 0
      %445 = vperm.xlu0 %444, %v439
      %v446 = vpop.permute.xlu0 %445
      %449 = vset.pattern.permute.xlu0 0
      %450 = vperm.xlu0 %449, %v440
      %v451 = vpop.permute.xlu0 %450
      %454 = vset.pattern.permute.xlu0 0
      %455 = vperm.xlu0 %454, %v441
      %v456 = vpop.permute.xlu0 %455
      %459 = vset.pattern.permute.xlu0 0
      %460 = vperm.xlu0 %459, %v442
      %v461 = vpop.permute.xlu0 %460
      %v463 = vadd.f32 %v431, %v446
      %v464 = vadd.f32 %v432, %v446
      %v465 = vadd.f32 %v433, %v451
      %v466 = vadd.f32 %v434, %v451
      %v467 = vadd.f32 %v435, %v456
      %v468 = vadd.f32 %v436, %v456
      %v469 = vadd.f32 %v437, %v461
      %v470 = vadd.f32 %v438, %v461
      %v471 = vmax.f32 %v463, 0.0
      %v472 = vmax.f32 %v464, 0.0
      %v473 = vmax.f32 %v465, 0.0
      %v474 = vmax.f32 %v466, 0.0
      %v475 = vmax.f32 %v467, 0.0
      %v476 = vmax.f32 %v468, 0.0
      %v477 = vmax.f32 %v469, 0.0
      %v478 = vmax.f32 %v470, 0.0
      %v479 = vld [vmem:[%s3] sm:$0xf]
      %v480 = vld [vmem:[%s3 + $0x4] sm:$0xf]
      %v481 = vld [vmem:[%s3 + $0x8] sm:$0xf]
      %v482 = vld [vmem:[%s3 + $0xc] sm:$0xf]
      %v483 = vld [vmem:[%s3 + $0x10] sm:$0xf]
      %v484 = vld [vmem:[%s3 + $0x14] sm:$0xf]
      %v485 = vld [vmem:[%s3 + $0x18] sm:$0xf]
      %v486 = vld [vmem:[%s3 + $0x1c] sm:$0xf]
      %v487 = vpack.c.bf16 %v473, %v471
      %v488 = vpack.c.bf16 %v474, %v472
      %v489 = vpack.c.bf16 %v477, %v475
      %v490 = vpack.c.bf16 %v478, %v476
      %v491 = vld [vmem:[%s4] sm:$0xff]
      %v492 = vld [vmem:[%s4 + $0x8] sm:$0xff]
      %v493 = vld [vmem:[%s4 + $0x10] sm:$0xff]
      %v494 = vld [vmem:[%s4 + $0x18] sm:$0xff]
      %v495 = vld [vmem:[%s4 + $0x20] sm:$0xff]
      %v496 = vld [vmem:[%s4 + $0x28] sm:$0xff]
      %v497 = vld [vmem:[%s4 + $0x30] sm:$0xff]
      %v498 = vld [vmem:[%s4 + $0x38] sm:$0xff]
      %500 = vset.pattern.permute.xlu0 0
      %501 = vperm.xlu0 %500, %v491
      %v502 = vpop.permute.xlu0 %501
      %505 = vset.pattern.permute.xlu0 0
      %506 = vperm.xlu0 %505, %v492
      %v507 = vpop.permute.xlu0 %506
      %510 = vset.pattern.permute.xlu0 0
      %511 = vperm.xlu0 %510, %v493
      %v512 = vpop.permute.xlu0 %511
      %515 = vset.pattern.permute.xlu0 0
      %516 = vperm.xlu0 %515, %v494
      %v517 = vpop.permute.xlu0 %516
      %520 = vset.pattern.permute.xlu0 0
      %521 = vperm.xlu0 %520, %v495
      %v522 = vpop.permute.xlu0 %521
      %525 = vset.pattern.permute.xlu0 0
      %526 = vperm.xlu0 %525, %v496
      %v527 = vpop.permute.xlu0 %526
      %530 = vset.pattern.permute.xlu0 0
      %531 = vperm.xlu0 %530, %v497
      %v532 = vpop.permute.xlu0 %531
      %535 = vset.pattern.permute.xlu0 0
      %536 = vperm.xlu0 %535, %v498
      %v537 = vpop.permute.xlu0 %536
      %v547 = vunpack.c.l.b16 %v479
      %v548 = vunpack.c.l.b16 %v480
      %v549 = vunpack.c.l.b16 %v481
      %v550 = vunpack.c.l.b16 %v482
      %v551 = vunpack.c.l.b16 %v483
      %v552 = vunpack.c.l.b16 %v484
      %v553 = vunpack.c.l.b16 %v485
      %v554 = vunpack.c.l.b16 %v486
      %v555 = vpack.c.b16 %v548, %v547
      %v556 = vpack.c.b16 %v550, %v549
      %v557 = vpack.c.b16 %v552, %v551
      %v558 = vpack.c.b16 %v554, %v553
      %vm559 = vcmask 261120
      %v561 = vsel %vm559, %v555, 0
      %v564 = vsel %vm559, %v556, 0
      %v567 = vsel %vm559, %v557, 0
      %v570 = vsel %vm559, %v558, 0
      %572 = vmatprep.subr.bf16.mxu0 0
      %573 = vmatpush1.bf16.msra.mxu0 0
      %574 = vmatprep.subr.bf16.mxu0 0
      %575 = vmatpush1.bf16.msra.mxu0 0
      %576 = vmatprep.subr.bf16.mxu0 0
      %577 = vmatpush1.bf16.msra.mxu0 0
      %578 = vmatprep.subr.bf16.mxu0 0
      %579 = vmatpush1.bf16.msra.mxu0 0
      %580 = vmatprep.subr.bf16.mxu0 0
      %581 = vmatpush1.bf16.msra.mxu0 0
      %582 = vmatprep.subr.bf16.mxu0 0
      %583 = vmatpush1.bf16.msra.mxu0 0
      %584 = vmatprep.subr.bf16.mxu0 %v490
      %585 = vmatpush1.bf16.msra.mxu0 %v489
      %586 = vmatprep.subr.bf16.mxu0 %v488
      %587 = vmatpush1.bf16.msra.mxu0 %v487
      %588 = vmatprep.subr.bf16.mxu0 0
      %589 = vmatpush2.bf16.msra.mxu0 0
      %590 = vmatprep.subr.bf16.mxu0 0
      %591 = vmatpush2.bf16.msra.mxu0 0
      %592 = vmatprep.subr.bf16.mxu0 0
      %593 = vmatpush2.bf16.msra.mxu0 0
      %594 = vmatprep.subr.bf16.mxu0 0
      %595 = vmatpush2.bf16.msra.mxu0 0
      %596 = vmatprep.subr.bf16.mxu0 0
      %597 = vmatpush2.bf16.msra.mxu0 0
      %598 = vmatprep.subr.bf16.mxu0 0
      %599 = vmatpush2.bf16.msra.mxu0 0
      %600 = vmatprep.subr.bf16.mxu0 0
      %601 = vmatpush2.bf16.msra.mxu0 0
      %602 = vmatprep.subr.bf16.mxu0 0
      %603 = vmatpush2.bf16.msra.mxu0 0
      %604 = vmatprep.mubr.bf16.mxu0 0
      %605 = vmatmul.mubr.bf16.gmra.mxu0 %v561
      %v606 = vpop.f32.mrf.mxu0
      %v607 = vadd.f32 %v502, %v606
      %v608 = vpop.f32.mrf.mxu0
      %v609 = vadd.f32 %v502, %v608
      %v610 = vpop.f32.mrf.mxu0
      %v611 = vadd.f32 %v507, %v610
      %v612 = vpop.f32.mrf.mxu0
      %v613 = vadd.f32 %v507, %v612
      %614 = vmatprep.mubr.bf16.mxu0 0
      %615 = vmatmul.mubr.bf16.gmra.mxu0 %v564
      %v616 = vpop.f32.mrf.mxu0
      %v617 = vadd.f32 %v512, %v616
      %v618 = vpop.f32.mrf.mxu0
      %v619 = vadd.f32 %v512, %v618
      %v620 = vpop.f32.mrf.mxu0
      %v621 = vadd.f32 %v517, %v620
      %v622 = vpop.f32.mrf.mxu0
      %v623 = vadd.f32 %v517, %v622
      %624 = vmatprep.mubr.bf16.mxu0 0
      %625 = vmatmul.mubr.bf16.gmra.mxu0 %v567
      %v626 = vpop.f32.mrf.mxu0
      %v627 = vadd.f32 %v522, %v626
      %v628 = vpop.f32.mrf.mxu0
      %v629 = vadd.f32 %v522, %v628
      %v630 = vpop.f32.mrf.mxu0
      %v631 = vadd.f32 %v527, %v630
      %v632 = vpop.f32.mrf.mxu0
      %v633 = vadd.f32 %v527, %v632
      %634 = vmatprep.mubr.bf16.mxu0 0
      %635 = vmatmul.mubr.bf16.gmra.mxu0 %v570
      %v636 = vpop.f32.mrf.mxu0
      %v637 = vadd.f32 %v532, %v636
      %v638 = vpop.f32.mrf.mxu0
      %v639 = vadd.f32 %v532, %v638
      %v640 = vpop.f32.mrf.mxu0
      %v641 = vadd.f32 %v537, %v640
      %v642 = vpop.f32.mrf.mxu0
      %v643 = vadd.f32 %v537, %v642
      %644 = vdwg.mxu0
      %v645 = vmax.f32 %v607, 0.0
      %v646 = vmax.f32 %v609, 0.0
      %v647 = vmax.f32 %v611, 0.0
      %v648 = vmax.f32 %v613, 0.0
      %v649 = vmax.f32 %v617, 0.0
      %v650 = vmax.f32 %v619, 0.0
      %v651 = vmax.f32 %v621, 0.0
      %v652 = vmax.f32 %v623, 0.0
      %v653 = vmax.f32 %v627, 0.0
      %v654 = vmax.f32 %v629, 0.0
      %v655 = vmax.f32 %v631, 0.0
      %v656 = vmax.f32 %v633, 0.0
      %v657 = vmax.f32 %v637, 0.0
      %v658 = vmax.f32 %v639, 0.0
      %v659 = vmax.f32 %v641, 0.0
      %v660 = vmax.f32 %v643, 0.0
      %v661 = vld [vmem:[%s5] sm:$0xf]
      %v662 = vld [vmem:[%s5 + $0x4] sm:$0xf]
      %v663 = vld [vmem:[%s5 + $0x8] sm:$0xf]
      %v664 = vld [vmem:[%s5 + $0xc] sm:$0xf]
      %v665 = vld [vmem:[%s5 + $0x10] sm:$0xf]
      %v666 = vld [vmem:[%s5 + $0x14] sm:$0xf]
      %v667 = vld [vmem:[%s5 + $0x18] sm:$0xf]
      %v668 = vld [vmem:[%s5 + $0x1c] sm:$0xf]
      %v669 = vld [vmem:[%s5 + $0x20] sm:$0xf]
      %v670 = vld [vmem:[%s5 + $0x24] sm:$0xf]
      %v671 = vld [vmem:[%s5 + $0x28] sm:$0xf]
      %v672 = vld [vmem:[%s5 + $0x2c] sm:$0xf]
      %v673 = vld [vmem:[%s5 + $0x30] sm:$0xf]
      %v674 = vld [vmem:[%s5 + $0x34] sm:$0xf]
      %v675 = vld [vmem:[%s5 + $0x38] sm:$0xf]
      %v676 = vld [vmem:[%s5 + $0x3c] sm:$0xf]
      %v677 = vpack.c.bf16 %v647, %v645
      %v678 = vpack.c.bf16 %v648, %v646
      %v679 = vpack.c.bf16 %v651, %v649
      %v680 = vpack.c.bf16 %v652, %v650
      %v681 = vpack.c.bf16 %v655, %v653
      %v682 = vpack.c.bf16 %v656, %v654
      %v683 = vpack.c.bf16 %v659, %v657
      %v684 = vpack.c.bf16 %v660, %v658
      %v685 = vld [vmem:[%s6] sm:$0xff]
      %v686 = vld [vmem:[%s6 + $0x8] sm:$0xff]
      %v687 = vld [vmem:[%s6 + $0x10] sm:$0xff]
      %v688 = vld [vmem:[%s6 + $0x18] sm:$0xff]
      %v689 = vld [vmem:[%s6 + $0x20] sm:$0xff]
      %v690 = vld [vmem:[%s6 + $0x28] sm:$0xff]
      %v691 = vld [vmem:[%s6 + $0x30] sm:$0xff]
      %v692 = vld [vmem:[%s6 + $0x38] sm:$0xff]
      %v693 = vld [vmem:[%s6 + $0x40] sm:$0xff]
      %v694 = vld [vmem:[%s6 + $0x48] sm:$0xff]
      %v695 = vld [vmem:[%s6 + $0x50] sm:$0xff]
      %v696 = vld [vmem:[%s6 + $0x58] sm:$0xff]
      %v697 = vld [vmem:[%s6 + $0x60] sm:$0xff]
      %v698 = vld [vmem:[%s6 + $0x68] sm:$0xff]
      %v699 = vld [vmem:[%s6 + $0x70] sm:$0xff]
      %v700 = vld [vmem:[%s6 + $0x78] sm:$0xff]
      %702 = vset.pattern.permute.xlu0 0
      %703 = vperm.xlu0 %702, %v685
      %v704 = vpop.permute.xlu0 %703
      %707 = vset.pattern.permute.xlu0 0
      %708 = vperm.xlu0 %707, %v686
      %v709 = vpop.permute.xlu0 %708
      %712 = vset.pattern.permute.xlu0 0
      %713 = vperm.xlu0 %712, %v687
      %v714 = vpop.permute.xlu0 %713
      %717 = vset.pattern.permute.xlu0 0
      %718 = vperm.xlu0 %717, %v688
      %v719 = vpop.permute.xlu0 %718
      %722 = vset.pattern.permute.xlu0 0
      %723 = vperm.xlu0 %722, %v689
      %v724 = vpop.permute.xlu0 %723
      %727 = vset.pattern.permute.xlu0 0
      %728 = vperm.xlu0 %727, %v690
      %v729 = vpop.permute.xlu0 %728
      %732 = vset.pattern.permute.xlu0 0
      %733 = vperm.xlu0 %732, %v691
      %v734 = vpop.permute.xlu0 %733
      %737 = vset.pattern.permute.xlu0 0
      %738 = vperm.xlu0 %737, %v692
      %v739 = vpop.permute.xlu0 %738
      %742 = vset.pattern.permute.xlu0 0
      %743 = vperm.xlu0 %742, %v693
      %v744 = vpop.permute.xlu0 %743
      %747 = vset.pattern.permute.xlu0 0
      %748 = vperm.xlu0 %747, %v694
      %v749 = vpop.permute.xlu0 %748
      %752 = vset.pattern.permute.xlu0 0
      %753 = vperm.xlu0 %752, %v695
      %v754 = vpop.permute.xlu0 %753
      %757 = vset.pattern.permute.xlu0 0
      %758 = vperm.xlu0 %757, %v696
      %v759 = vpop.permute.xlu0 %758
      %762 = vset.pattern.permute.xlu0 0
      %763 = vperm.xlu0 %762, %v697
      %v764 = vpop.permute.xlu0 %763
      %767 = vset.pattern.permute.xlu0 0
      %768 = vperm.xlu0 %767, %v698
      %v769 = vpop.permute.xlu0 %768
      %772 = vset.pattern.permute.xlu0 0
      %773 = vperm.xlu0 %772, %v699
      %v774 = vpop.permute.xlu0 %773
      %777 = vset.pattern.permute.xlu0 0
      %778 = vperm.xlu0 %777, %v700
      %v779 = vpop.permute.xlu0 %778
      %v797 = vunpack.c.l.b16 %v661
      %v798 = vunpack.c.l.b16 %v662
      %v799 = vunpack.c.l.b16 %v663
      %v800 = vunpack.c.l.b16 %v664
      %v801 = vunpack.c.l.b16 %v665
      %v802 = vunpack.c.l.b16 %v666
      %v803 = vunpack.c.l.b16 %v667
      %v804 = vunpack.c.l.b16 %v668
      %v805 = vunpack.c.l.b16 %v669
      %v806 = vunpack.c.l.b16 %v670
      %v807 = vunpack.c.l.b16 %v671
      %v808 = vunpack.c.l.b16 %v672
      %v809 = vunpack.c.l.b16 %v673
      %v810 = vunpack.c.l.b16 %v674
      %v811 = vunpack.c.l.b16 %v675
      %v812 = vunpack.c.l.b16 %v676
      %v813 = vpack.c.b16 %v798, %v797
      %v814 = vpack.c.b16 %v800, %v799
      %v815 = vpack.c.b16 %v802, %v801
      %v816 = vpack.c.b16 %v804, %v803
      %v817 = vpack.c.b16 %v806, %v805
      %v818 = vpack.c.b16 %v808, %v807
      %v819 = vpack.c.b16 %v810, %v809
      %v820 = vpack.c.b16 %v812, %v811
      %vm821 = vcmask 523264
      %v823 = vsel %vm821, %v813, 0
      %v826 = vsel %vm821, %v814, 0
      %v829 = vsel %vm821, %v815, 0
      %v832 = vsel %vm821, %v816, 0
      %v835 = vsel %vm821, %v817, 0
      %v838 = vsel %vm821, %v818, 0
      %v841 = vsel %vm821, %v819, 0
      %v844 = vsel %vm821, %v820, 0
      %846 = vmatprep.subr.bf16.mxu0 0
      %847 = vmatpush1.bf16.msra.mxu0 0
      %848 = vmatprep.subr.bf16.mxu0 0
      %849 = vmatpush1.bf16.msra.mxu0 0
      %850 = vmatprep.subr.bf16.mxu0 0
      %851 = vmatpush1.bf16.msra.mxu0 0
      %852 = vmatprep.subr.bf16.mxu0 0
      %853 = vmatpush1.bf16.msra.mxu0 0
      %854 = vmatprep.subr.bf16.mxu0 %v684
      %855 = vmatpush1.bf16.msra.mxu0 %v683
      %856 = vmatprep.subr.bf16.mxu0 %v682
      %857 = vmatpush1.bf16.msra.mxu0 %v681
      %858 = vmatprep.subr.bf16.mxu0 %v680
      %859 = vmatpush1.bf16.msra.mxu0 %v679
      %860 = vmatprep.subr.bf16.mxu0 %v678
      %861 = vmatpush1.bf16.msra.mxu0 %v677
      %862 = vmatprep.subr.bf16.mxu0 0
      %863 = vmatpush2.bf16.msra.mxu0 0
      %864 = vmatprep.subr.bf16.mxu0 0
      %865 = vmatpush2.bf16.msra.mxu0 0
      %866 = vmatprep.subr.bf16.mxu0 0
      %867 = vmatpush2.bf16.msra.mxu0 0
      %868 = vmatprep.subr.bf16.mxu0 0
      %869 = vmatpush2.bf16.msra.mxu0 0
      %870 = vmatprep.subr.bf16.mxu0 0
      %871 = vmatpush2.bf16.msra.mxu0 0
      %872 = vmatprep.subr.bf16.mxu0 0
      %873 = vmatpush2.bf16.msra.mxu0 0
      %874 = vmatprep.subr.bf16.mxu0 0
      %875 = vmatpush2.bf16.msra.mxu0 0
      %876 = vmatprep.subr.bf16.mxu0 0
      %877 = vmatpush2.bf16.msra.mxu0 0
      %878 = vmatprep.mubr.bf16.mxu0 0
      %879 = vmatmul.mubr.bf16.gmra.mxu0 %v823
      %v880 = vpop.f32.mrf.mxu0
      %v881 = vadd.f32 %v704, %v880
      %v882 = vpop.f32.mrf.mxu0
      %v883 = vadd.f32 %v704, %v882
      %v884 = vpop.f32.mrf.mxu0
      %v885 = vadd.f32 %v709, %v884
      %v886 = vpop.f32.mrf.mxu0
      %v887 = vadd.f32 %v709, %v886
      %888 = vmatprep.mubr.bf16.mxu0 0
      %889 = vmatmul.mubr.bf16.gmra.mxu0 %v826
      %v890 = vpop.f32.mrf.mxu0
      %v891 = vadd.f32 %v714, %v890
      %v892 = vpop.f32.mrf.mxu0
      %v893 = vadd.f32 %v714, %v892
      %v894 = vpop.f32.mrf.mxu0
      %v895 = vadd.f32 %v719, %v894
      %v896 = vpop.f32.mrf.mxu0
      %v897 = vadd.f32 %v719, %v896
      %898 = vmatprep.mubr.bf16.mxu0 0
      %899 = vmatmul.mubr.bf16.gmra.mxu0 %v829
      %v900 = vpop.f32.mrf.mxu0
      %v901 = vadd.f32 %v724, %v900
      %v902 = vpop.f32.mrf.mxu0
      %v903 = vadd.f32 %v724, %v902
      %v904 = vpop.f32.mrf.mxu0
      %v905 = vadd.f32 %v729, %v904
      %v906 = vpop.f32.mrf.mxu0
      %v907 = vadd.f32 %v729, %v906
      %908 = vmatprep.mubr.bf16.mxu0 0
      %909 = vmatmul.mubr.bf16.gmra.mxu0 %v832
      %v910 = vpop.f32.mrf.mxu0
      %v911 = vadd.f32 %v734, %v910
      %v912 = vpop.f32.mrf.mxu0
      %v913 = vadd.f32 %v734, %v912
      %v914 = vpop.f32.mrf.mxu0
      %v915 = vadd.f32 %v739, %v914
      %v916 = vpop.f32.mrf.mxu0
      %v917 = vadd.f32 %v739, %v916
      %918 = vmatprep.mubr.bf16.mxu0 0
      %919 = vmatmul.mubr.bf16.gmra.mxu0 %v835
      %v920 = vpop.f32.mrf.mxu0
      %v921 = vadd.f32 %v744, %v920
      %v922 = vpop.f32.mrf.mxu0
      %v923 = vadd.f32 %v744, %v922
      %v924 = vpop.f32.mrf.mxu0
      %v925 = vadd.f32 %v749, %v924
      %v926 = vpop.f32.mrf.mxu0
      %v927 = vadd.f32 %v749, %v926
      %928 = vmatprep.mubr.bf16.mxu0 0
      %929 = vmatmul.mubr.bf16.gmra.mxu0 %v838
      %v930 = vpop.f32.mrf.mxu0
      %v931 = vadd.f32 %v754, %v930
      %v932 = vpop.f32.mrf.mxu0
      %v933 = vadd.f32 %v754, %v932
      %v934 = vpop.f32.mrf.mxu0
      %v935 = vadd.f32 %v759, %v934
      %v936 = vpop.f32.mrf.mxu0
      %v937 = vadd.f32 %v759, %v936
      %938 = vmatprep.mubr.bf16.mxu0 0
      %939 = vmatmul.mubr.bf16.gmra.mxu0 %v841
      %v940 = vpop.f32.mrf.mxu0
      %v941 = vadd.f32 %v764, %v940
      %v942 = vpop.f32.mrf.mxu0
      %v943 = vadd.f32 %v764, %v942
      %v944 = vpop.f32.mrf.mxu0
      %v945 = vadd.f32 %v769, %v944
      %v946 = vpop.f32.mrf.mxu0
      %v947 = vadd.f32 %v769, %v946
      %948 = vmatprep.mubr.bf16.mxu0 0
      %949 = vmatmul.mubr.bf16.gmra.mxu0 %v844
      %v950 = vpop.f32.mrf.mxu0
      %v951 = vadd.f32 %v774, %v950
      %v952 = vpop.f32.mrf.mxu0
      %v953 = vadd.f32 %v774, %v952
      %v954 = vpop.f32.mrf.mxu0
      %v955 = vadd.f32 %v779, %v954
      %v956 = vpop.f32.mrf.mxu0
      %v957 = vadd.f32 %v779, %v956
      %958 = vdwg.mxu0
      %v959 = vmax.f32 %v881, 0.0
      %v960 = vmax.f32 %v883, 0.0
      %v961 = vmax.f32 %v885, 0.0
      %v962 = vmax.f32 %v887, 0.0
      %v963 = vmax.f32 %v891, 0.0
      %v964 = vmax.f32 %v893, 0.0
      %v965 = vmax.f32 %v895, 0.0
      %v966 = vmax.f32 %v897, 0.0
      %v967 = vmax.f32 %v901, 0.0
      %v968 = vmax.f32 %v903, 0.0
      %v969 = vmax.f32 %v905, 0.0
      %v970 = vmax.f32 %v907, 0.0
      %v971 = vmax.f32 %v911, 0.0
      %v972 = vmax.f32 %v913, 0.0
      %v973 = vmax.f32 %v915, 0.0
      %v974 = vmax.f32 %v917, 0.0
      %v975 = vmax.f32 %v921, 0.0
      %v976 = vmax.f32 %v923, 0.0
      %v977 = vmax.f32 %v925, 0.0
      %v978 = vmax.f32 %v927, 0.0
      %v979 = vmax.f32 %v931, 0.0
      %v980 = vmax.f32 %v933, 0.0
      %v981 = vmax.f32 %v935, 0.0
      %v982 = vmax.f32 %v937, 0.0
      %v983 = vmax.f32 %v941, 0.0
      %v984 = vmax.f32 %v943, 0.0
      %v985 = vmax.f32 %v945, 0.0
      %v986 = vmax.f32 %v947, 0.0
      %v987 = vmax.f32 %v951, 0.0
      %v988 = vmax.f32 %v953, 0.0
      %v989 = vmax.f32 %v955, 0.0
      %v990 = vmax.f32 %v957, 0.0
      %v991 = vld [vmem:[%s7] sm:$0xff]
      %v992 = vld [vmem:[%s7 + $0x8] sm:$0xff]
      %v993 = vld [vmem:[%s7 + $0x10] sm:$0xff]
      %v994 = vld [vmem:[%s7 + $0x18] sm:$0xff]
      %v995 = vld [vmem:[%s7 + $0x20] sm:$0xff]
      %v996 = vld [vmem:[%s7 + $0x28] sm:$0xff]
      %v997 = vld [vmem:[%s7 + $0x30] sm:$0xff]
      %v998 = vld [vmem:[%s7 + $0x38] sm:$0xff]
      %v999 = vld [vmem:[%s7 + $0x40] sm:$0xff]
      %v1000 = vld [vmem:[%s7 + $0x48] sm:$0xff]
      %v1001 = vld [vmem:[%s7 + $0x50] sm:$0xff]
      %v1002 = vld [vmem:[%s7 + $0x58] sm:$0xff]
      %v1003 = vld [vmem:[%s7 + $0x60] sm:$0xff]
      %v1004 = vld [vmem:[%s7 + $0x68] sm:$0xff]
      %v1005 = vld [vmem:[%s7 + $0x70] sm:$0xff]
      %v1006 = vld [vmem:[%s7 + $0x78] sm:$0xff]
      %1008 = vset.pattern.permute.xlu0 0
      %1009 = vperm.xlu0 %1008, %v991
      %v1010 = vpop.permute.xlu0 %1009
      %1013 = vset.pattern.permute.xlu0 0
      %1014 = vperm.xlu0 %1013, %v992
      %v1015 = vpop.permute.xlu0 %1014
      %1018 = vset.pattern.permute.xlu0 0
      %1019 = vperm.xlu0 %1018, %v993
      %v1020 = vpop.permute.xlu0 %1019
      %1023 = vset.pattern.permute.xlu0 0
      %1024 = vperm.xlu0 %1023, %v994
      %v1025 = vpop.permute.xlu0 %1024
      %1028 = vset.pattern.permute.xlu0 0
      %1029 = vperm.xlu0 %1028, %v995
      %v1030 = vpop.permute.xlu0 %1029
      %1033 = vset.pattern.permute.xlu0 0
      %1034 = vperm.xlu0 %1033, %v996
      %v1035 = vpop.permute.xlu0 %1034
      %1038 = vset.pattern.permute.xlu0 0
      %1039 = vperm.xlu0 %1038, %v997
      %v1040 = vpop.permute.xlu0 %1039
      %1043 = vset.pattern.permute.xlu0 0
      %1044 = vperm.xlu0 %1043, %v998
      %v1045 = vpop.permute.xlu0 %1044
      %1048 = vset.pattern.permute.xlu0 0
      %1049 = vperm.xlu0 %1048, %v999
      %v1050 = vpop.permute.xlu0 %1049
      %1053 = vset.pattern.permute.xlu0 0
      %1054 = vperm.xlu0 %1053, %v1000
      %v1055 = vpop.permute.xlu0 %1054
      %1058 = vset.pattern.permute.xlu0 0
      %1059 = vperm.xlu0 %1058, %v1001
      %v1060 = vpop.permute.xlu0 %1059
      %1063 = vset.pattern.permute.xlu0 0
      %1064 = vperm.xlu0 %1063, %v1002
      %v1065 = vpop.permute.xlu0 %1064
      %1068 = vset.pattern.permute.xlu0 0
      %1069 = vperm.xlu0 %1068, %v1003
      %v1070 = vpop.permute.xlu0 %1069
      %1073 = vset.pattern.permute.xlu0 0
      %1074 = vperm.xlu0 %1073, %v1004
      %v1075 = vpop.permute.xlu0 %1074
      %1078 = vset.pattern.permute.xlu0 0
      %1079 = vperm.xlu0 %1078, %v1005
      %v1080 = vpop.permute.xlu0 %1079
      %1083 = vset.pattern.permute.xlu0 0
      %1084 = vperm.xlu0 %1083, %v1006
      %v1085 = vpop.permute.xlu0 %1084
      %v1087 = vmul.f32 %v959, %v1010
      %v1088 = vmul.f32 %v960, %v1010
      %v1089 = vmul.f32 %v961, %v1015
      %v1090 = vmul.f32 %v962, %v1015
      %v1091 = vmul.f32 %v963, %v1020
      %v1092 = vmul.f32 %v964, %v1020
      %v1093 = vmul.f32 %v965, %v1025
      %v1094 = vmul.f32 %v966, %v1025
      %v1095 = vmul.f32 %v967, %v1030
      %v1096 = vmul.f32 %v968, %v1030
      %v1097 = vmul.f32 %v969, %v1035
      %v1098 = vmul.f32 %v970, %v1035
      %v1099 = vmul.f32 %v971, %v1040
      %v1100 = vmul.f32 %v972, %v1040
      %v1101 = vmul.f32 %v973, %v1045
      %v1102 = vmul.f32 %v974, %v1045
      %v1103 = vmul.f32 %v975, %v1050
      %v1104 = vmul.f32 %v976, %v1050
      %v1105 = vmul.f32 %v977, %v1055
      %v1106 = vmul.f32 %v978, %v1055
      %v1107 = vmul.f32 %v979, %v1060
      %v1108 = vmul.f32 %v980, %v1060
      %v1109 = vmul.f32 %v981, %v1065
      %v1110 = vmul.f32 %v982, %v1065
      %v1111 = vmul.f32 %v983, %v1070
      %v1112 = vmul.f32 %v984, %v1070
      %v1113 = vmul.f32 %v985, %v1075
      %v1114 = vmul.f32 %v986, %v1075
      %v1115 = vmul.f32 %v987, %v1080
      %v1116 = vmul.f32 %v988, %v1080
      %v1117 = vmul.f32 %v989, %v1085
      %v1118 = vmul.f32 %v990, %v1085
      %v1119 = vadd.f32 %v1087, %v1089
      %v1120 = vadd.f32 %v1119, %v1091
      %v1121 = vadd.f32 %v1120, %v1093
      %v1122 = vadd.f32 %v1121, %v1095
      %v1123 = vadd.f32 %v1122, %v1097
      %v1124 = vadd.f32 %v1123, %v1099
      %v1125 = vadd.f32 %v1124, %v1101
      %v1126 = vadd.f32 %v1125, %v1103
      %v1127 = vadd.f32 %v1126, %v1105
      %v1128 = vadd.f32 %v1127, %v1107
      %v1129 = vadd.f32 %v1128, %v1109
      %v1130 = vadd.f32 %v1129, %v1111
      %v1131 = vadd.f32 %v1130, %v1113
      %v1132 = vadd.f32 %v1131, %v1115
      %v1133 = vadd.f32 %v1132, %v1117
      %v1134 = vrot.slane %v1133, 4
      %v1135 = vadd.f32 %v1133, %v1134
      %v1136 = vrot.slane %v1135, 2
      %v1137 = vadd.f32 %v1135, %v1136
      %v1138 = vrot.slane %v1137, 1
      %v1139 = vadd.f32 %v1137, %v1138
      %v1140 = vadd.f32 %v1088, %v1090
      %v1141 = vadd.f32 %v1140, %v1092
      %v1142 = vadd.f32 %v1141, %v1094
      %v1143 = vadd.f32 %v1142, %v1096
      %v1144 = vadd.f32 %v1143, %v1098
      %v1145 = vadd.f32 %v1144, %v1100
      %v1146 = vadd.f32 %v1145, %v1102
      %v1147 = vadd.f32 %v1146, %v1104
      %v1148 = vadd.f32 %v1147, %v1106
      %v1149 = vadd.f32 %v1148, %v1108
      %v1150 = vadd.f32 %v1149, %v1110
      %v1151 = vadd.f32 %v1150, %v1112
      %v1152 = vadd.f32 %v1151, %v1114
      %v1153 = vadd.f32 %v1152, %v1116
      %v1154 = vadd.f32 %v1153, %v1118
      %v1155 = vrot.slane %v1154, 4
      %v1156 = vadd.f32 %v1154, %v1155
      %v1157 = vrot.slane %v1156, 2
      %v1158 = vadd.f32 %v1156, %v1157
      %v1159 = vrot.slane %v1158, 1
      %v1160 = vadd.f32 %v1158, %v1159
      %v1161 = vld [vmem:[#allocation2] sm:$0x1]
      %1163 = vset.pattern.permute.xlu0 0
      %1164 = vperm.xlu0 %1163, %v1161
      %v1165 = vpop.permute.xlu0 %1164
      %v1167 = vlaneseq
      %v1168 = vshrl.u32 %v1167, 7
      %v1169 = vsub.s32 0, %v1168
      %v1170 = vrot.slane %v1165, %v1169
      %v1171 = vadd.f32 %v1139, %v1170
      %v1172 = vadd.f32 %v1160, %v1170
      %v1175 = vcombine.low %v1171, %v1172
      %v1177 = vunpack.c.l.s4 1966171168
      %v1178 = vunpack.c.0.s8 %v1177
      %v1179 = vlaneseq
      %v1180 = vshrl.u32 %v1179, 7
      %v1181 = vsub.s32 %v1178, %v1180
      %v1182 = vrot.slane %v1175, %v1181
      %v1184 = vunpack.c.l.s4 1966171168
      %v1185 = vunpack.c.0.s8 %v1184
      %v1186 = vlaneseq
      %v1187 = vshrl.u32 %v1186, 7
      %v1188 = vsub.s32 %v1185, %v1187
      %v1189 = vrot.slane %v1182, %v1188
      %v1191 = vlaneseq
      %vm1192 = vcmp.ge.s32.totalorder %v1191, 0
      %vm1193 = vcmp.lt.s32.totalorder %v1191, 256
      %vm1194 = vmand %vm1192, %vm1193
      %1195 = vst.msk [vmem:[%s334] sm:$0x3] %vm1194, %v1189
      %s1196 = smul.u32 2, %s22
      %p1197 = scmp.lt.s32.totalorder %s1196, 3
      %s1198 = scalar_select %p1197, %s1196, 3
      %s1199 = scalar_lea.vmem %s9, %s1198
      // Predicated region
      $region57: #{sara_forward.1} parent=55 // pred_check
        %p1200 = pneg %p234
      $region58: #{sara_forward.1} parent=55 // pred_check_branch
        %1202 = sbr.rel (%p1200) target = $region60
      $region59: #{sara_forward.1} parent=55 // pred_region
        %s1203 = smul.u32 2, %s22
      $region60: #{sara_forward.1} parent=55 // pred_fallthru
        _
    $region56: #{sara_forward.1} parent=5 // pred_fallthru
      _
    %p1204 = scmp.le.s32.totalorder 2, %s17
    // Predicated region
    $region61: #{sara_forward.1} parent=5 // pred_check
      %p1205 = pneg %p1204
    $region62: #{sara_forward.1} parent=5 // pred_check_branch
      %1207 = sbr.rel (%p1205) target = $region64
    $region63: #{sara_forward.1} parent=5 // pred_region
      %s1208 = ssub.s32 %s17, 2
      // Predicated region
      $region65: #{sara_forward.1} parent=63 // pred_check
        %p1209 = pneg %p240
      $region66: #{sara_forward.1} parent=63 // pred_check_branch
        %1211 = sbr.rel (%p1209) target = $region68
      $region67: #{sara_forward.1} parent=63 // pred_region
        %s1212 = smul.u32 2, %s23
        %p1213 = scmp.lt.s32.totalorder %s1212, 3
        %s1214 = scalar_select %p1213, %s1212, 3
        %s1215 = scalar_lea.vmem %s9, %s1214
      $region68: #{sara_forward.1} parent=63 // pred_fallthru
        _
    $region64: #{sara_forward.1} parent=5 // pred_fallthru
      _
  $region6: #{sara_forward.1} parent=0 // loop_footer
    %s21 = sadd.s32 1, %s17
  $region7: #{sara_forward.1} parent=0 // loop_footer_branch
    %16 = sbr.rel target = $region3
  $region8: #{sara_forward.1} parent=0 // loop_exit
    _

</llo_original>
